<compile_context>
chip_gen: v6e
topology: v6e:2x2x1
jax: 0.10.0
libtpu: 0.0.40
codegen_flags: <defaults>
</compile_context>

<pallas_src>
import math

import jax
import jax.numpy as jnp
from jax.experimental import pallas as pl
from jax.experimental.pallas import tpu as pltpu


def _core_rnn_seq_kernel(h0_ref, g_ref, wi_ref, wh_ref, b_ref,
                         h_seq_ref, h_state):
    """One grid step == one RNN timestep.

    Refs (VMEM blocks):
      h0_ref : (B, H)        initial hidden state (read only at t == 0)
      g_ref  : (1, B, D_in)  glimpse for timestep t
      wi_ref : (D_in, H)     i2h weight, resident across all timesteps
      wh_ref : (H, H)        h2h weight, resident across all timesteps
      b_ref  : (1, H)        combined bias (bi + bh), resident
      h_seq_ref : (1, B, H)  output slab for timestep t (lane-dense)
      h_state   : (B, H)     VMEM scratch carrying the recurrent state
    """
    t = pl.program_id(0)

    @pl.when(t == 0)
    def _():
        h_state[...] = h0_ref[...]

    g_t = g_ref[0]                 # (B, D_in)
    h_prev = h_state[...]          # (B, H)

    h1 = jnp.dot(g_t, wi_ref[...], preferred_element_type=jnp.float32)
    h2 = jnp.dot(h_prev, wh_ref[...], preferred_element_type=jnp.float32)
    h_t = jnp.maximum(h1 + h2 + b_ref[...], 0.0)   # relu

    h_state[...] = h_t
    h_seq_ref[0] = h_t


def core_network_rnn_sequence(g_seq, h0, wi, bi, wh, bh):
    """Run T recurrent steps in a single pallas_call.

    g_seq: (T, B, input_size), h0: (B, hidden_size).
    Returns h_seq: (T, B, hidden_size) with h_seq[t] = h_t.
    """
    T, B, D_in = g_seq.shape
    H = wh.shape[1]

    # Pre-sum the two linear-layer biases outside the kernel (constant fold);
    # keep it 2-D (1, H) so the in-kernel add is a plain lane-dense broadcast.
    b2 = (bi + bh).reshape(1, H).astype(jnp.float32)

    h_seq = pl.pallas_call(
        _core_rnn_seq_kernel,
        out_shape=jax.ShapeDtypeStruct((T, B, H), jnp.float32),
        grid_spec=pltpu.PrefetchScalarGridSpec(
            num_scalar_prefetch=0,
            grid=(T,),
            in_specs=[
                pl.BlockSpec((B, H), lambda t: (0, 0)),           # h0 (resident)
                pl.BlockSpec((1, B, D_in), lambda t: (t, 0, 0)),  # g_seq[t]
                pl.BlockSpec((D_in, H), lambda t: (0, 0)),        # wi (resident)
                pl.BlockSpec((H, H), lambda t: (0, 0)),           # wh (resident)
                pl.BlockSpec((1, H), lambda t: (0, 0)),           # b  (resident)
            ],
            out_specs=pl.BlockSpec((1, B, H), lambda t: (t, 0, 0)),
            scratch_shapes=[pltpu.VMEM((B, H), jnp.float32)],
        ),
        compiler_params=pltpu.CompilerParams(
            # time axis carries the recurrence -> must be sequential
            dimension_semantics=("arbitrary",),
        ),
    )(h0, g_seq, wi, wh, b2)
    return h_seq


def core_network_rnn_step(g_t, h_t_prev, wi, bi, wh, bh):
    """Single-step API matching the PyTorch module's forward()."""
    h_seq = core_network_rnn_sequence(g_t[None], h_t_prev, wi, bi, wh, bh)
    return h_seq[0]


def init_params(key, input_size, hidden_size):
    """nn.Linear-style init (uniform +/- 1/sqrt(fan_in)); weights stored (in, out)."""
    k1, k2, k3, k4 = jax.random.split(key, 4)
    bi_bound = 1.0 / math.sqrt(input_size)
    bh_bound = 1.0 / math.sqrt(hidden_size)
    wi = jax.random.uniform(k1, (input_size, hidden_size), jnp.float32, -bi_bound, bi_bound)
    bi = jax.random.uniform(k2, (hidden_size,), jnp.float32, -bi_bound, bi_bound)
    wh = jax.random.uniform(k3, (hidden_size, hidden_size), jnp.float32, -bh_bound, bh_bound)
    bh = jax.random.uniform(k4, (hidden_size,), jnp.float32, -bh_bound, bh_bound)
    return wi, bi, wh, bh


if __name__ == "__main__":
    B = 8
    input_size = 256     # glimpse feature size
    hidden_size = 256    # RNN hidden size, lane-dense
    T = 6                # timesteps fused into one pallas_call

    key = jax.random.PRNGKey(0)
    k_g, k_h, k_p = jax.random.split(key, 3)

    g_seq = jax.random.normal(k_g, (T, B, input_size), dtype=jnp.float32)
    h0 = jax.random.normal(k_h, (B, hidden_size), dtype=jnp.float32)
    wi, bi, wh, bh = init_params(k_p, input_size, hidden_size)

    # --- Pallas: whole sequence in one call ---------------------------------
    h_seq = core_network_rnn_sequence(g_seq, h0, wi, bi, wh, bh)
    jax.block_until_ready(h_seq)

    # --- Pallas: single-step API (module semantics) -------------------------
    h1_step = core_network_rnn_step(g_seq[0], h0, wi, bi, wh, bh)
    jax.block_until_ready(h1_step)

    # --- Pure-JAX reference --------------------------------------------------
    def ref_step(g, h_prev):
        return jax.nn.relu(g @ wi + bi + h_prev @ wh + bh)

    h_ref = h0
    h_seq_ref = []
    for t in range(T):
        h_ref = ref_step(g_seq[t], h_ref)
        h_seq_ref.append(h_ref)
    h_seq_ref = jnp.stack(h_seq_ref, axis=0)

    assert h_seq.shape == (T, B, hidden_size)
    assert h1_step.shape == (B, hidden_size)
    assert jnp.allclose(h_seq, h_seq_ref, atol=1e-5, rtol=1e-5)
    assert jnp.allclose(h1_step, h_seq_ref[0], atol=1e-5, rtol=1e-5)

    print("KERNEL_OK")
</pallas_src>

<mosaic_0001>
module attributes {stable_mosaic.version = 11 : i64} {
  func.func @_core_rnn_seq_kernel(%arg0: i32, %arg1: memref<8x256xf32, #tpu.memory_space<vmem>>, %arg2: memref<1x8x256xf32, #tpu.memory_space<vmem>>, %arg3: memref<256x256xf32, #tpu.memory_space<vmem>>, %arg4: memref<256x256xf32, #tpu.memory_space<vmem>>, %arg5: memref<1x256xf32, #tpu.memory_space<vmem>>, %arg6: memref<1x8x256xf32, #tpu.memory_space<vmem>>, %arg7: memref<8x256xf32, #tpu.memory_space<vmem>>) attributes {dimension_semantics = [#tpu.dimension_semantics<arbitrary>], iteration_bounds = array<i64: 6>, scalar_prefetch = 0 : i64, scratch_operands = 1 : i64, tpu.core_type = #tpu.core_type<tc>, window_params = [{pipeline_mode = #tpu.pipeline_mode<synchronous>, transform_indices = @transform_0, window_bounds = array<i64: 8, 256>}, {transform_indices = @transform_1, window_bounds = array<i64: 1, 8, 256>}, {pipeline_mode = #tpu.pipeline_mode<synchronous>, transform_indices = @transform_2, window_bounds = array<i64: 256, 256>}, {pipeline_mode = #tpu.pipeline_mode<synchronous>, transform_indices = @transform_3, window_bounds = array<i64: 256, 256>}, {pipeline_mode = #tpu.pipeline_mode<synchronous>, transform_indices = @transform_4, window_bounds = array<i64: 1, 256>}, {transform_indices = @transform_5, window_bounds = array<i64: 1, 8, 256>}]} {
    %c0_i32 = arith.constant 0 : i32
    %0 = arith.cmpi eq, %arg0, %c0_i32 : i32
    %1 = arith.extui %0 : i1 to i32
    %c0_i32_0 = arith.constant 0 : i32
    %2 = arith.cmpi ne, %1, %c0_i32_0 : i32
    scf.if %2 {
      %c0_18 = arith.constant 0 : index
      %c0_19 = arith.constant 0 : index
      %20 = vector.load %arg1[%c0_18, %c0_19] : memref<8x256xf32, #tpu.memory_space<vmem>>, vector<8x256xf32>
      %c0_20 = arith.constant 0 : index
      %c0_21 = arith.constant 0 : index
      %21 = vector.load %arg7[%c0_20, %c0_21] : memref<8x256xf32, #tpu.memory_space<vmem>>, vector<8x256xf32>
      tpu.vector_store %arg7[%c0_20, %c0_21], %20 {strides = array<i32>} : memref<8x256xf32, #tpu.memory_space<vmem>>, vector<8x256xf32>,
    } else {
    }
    %c0 = arith.constant 0 : index
    %c0_1 = arith.constant 0 : index
    %c0_2 = arith.constant 0 : index
    %3 = vector.load %arg2[%c0, %c0_1, %c0_2] : memref<1x8x256xf32, #tpu.memory_space<vmem>>, vector<1x8x256xf32>
    %4 = vector.shape_cast %3 : vector<1x8x256xf32> to vector<8x256xf32>
    %c0_3 = arith.constant 0 : index
    %c0_4 = arith.constant 0 : index
    %5 = vector.load %arg7[%c0_3, %c0_4] : memref<8x256xf32, #tpu.memory_space<vmem>>, vector<8x256xf32>
    %c0_5 = arith.constant 0 : index
    %c0_6 = arith.constant 0 : index
    %6 = vector.load %arg3[%c0_5, %c0_6] : memref<256x256xf32, #tpu.memory_space<vmem>>, vector<256x256xf32>
    %cst = arith.constant dense<0.000000e+00> : vector<8x256xf32>
    %7 = tpu.matmul %4, %6, %cst {dimension_numbers = #tpu.dot_dimension_numbers<[1], [0], [0], [1], [0, 0, 1, 1], [], []>} : vector<8x256xf32>, vector<256x256xf32>, vector<8x256xf32> -> vector<8x256xf32>
    %c0_7 = arith.constant 0 : index
    %c0_8 = arith.constant 0 : index
    %8 = vector.load %arg4[%c0_7, %c0_8] : memref<256x256xf32, #tpu.memory_space<vmem>>, vector<256x256xf32>
    %cst_9 = arith.constant dense<0.000000e+00> : vector<8x256xf32>
    %9 = tpu.matmul %5, %8, %cst_9 {dimension_numbers = #tpu.dot_dimension_numbers<[1], [0], [0], [1], [0, 0, 1, 1], [], []>} : vector<8x256xf32>, vector<256x256xf32>, vector<8x256xf32> -> vector<8x256xf32>
    %10 = arith.addf %7, %9 : vector<8x256xf32>
    %c0_10 = arith.constant 0 : index
    %c0_11 = arith.constant 0 : index
    %11 = vector.load %arg5[%c0_10, %c0_11] : memref<1x256xf32, #tpu.memory_space<vmem>>, vector<1x256xf32>
    %12 = vector.broadcast %11 : vector<1x256xf32> to vector<8x256xf32>
    %13 = arith.addf %10, %12 : vector<8x256xf32>
    %cst_12 = arith.constant 0.000000e+00 : f32
    %14 = vector.broadcast %cst_12 : f32 to vector<8x256xf32>
    %15 = arith.maximumf %13, %14 : vector<8x256xf32>
    %c0_13 = arith.constant 0 : index
    %c0_14 = arith.constant 0 : index
    %16 = vector.load %arg7[%c0_13, %c0_14] : memref<8x256xf32, #tpu.memory_space<vmem>>, vector<8x256xf32>
    tpu.vector_store %arg7[%c0_13, %c0_14], %15 {strides = array<i32>} : memref<8x256xf32, #tpu.memory_space<vmem>>, vector<8x256xf32>,
    %c0_15 = arith.constant 0 : index
    %c0_16 = arith.constant 0 : index
    %c0_17 = arith.constant 0 : index
    %17 = vector.load %arg6[%c0_15, %c0_16, %c0_17] : memref<1x8x256xf32, #tpu.memory_space<vmem>>, vector<1x8x256xf32>
    %18 = vector.shape_cast %17 : vector<1x8x256xf32> to vector<8x256xf32>
    %19 = vector.shape_cast %15 : vector<8x256xf32> to vector<1x8x256xf32>
    tpu.vector_store %arg6[%c0_15, %c0_16, %c0_17], %19 {strides = array<i32>} : memref<1x8x256xf32, #tpu.memory_space<vmem>>, vector<1x8x256xf32>,
    return
  }
  func.func @transform_0(%arg0: i32) -> (i32, i32) {
    %c0_i32 = arith.constant 0 : i32
    %c0_i32_0 = arith.constant 0 : i32
    %c0_i32_1 = arith.constant 0 : i32
    return %c0_i32, %c0_i32_0 : i32, i32
  }
  func.func @transform_1(%arg0: i32) -> (i32, i32, i32) {
    %c0_i32 = arith.constant 0 : i32
    %c0_i32_0 = arith.constant 0 : i32
    %c0_i32_1 = arith.constant 0 : i32
    return %arg0, %c0_i32, %c0_i32_0 : i32, i32, i32
  }
  func.func @transform_2(%arg0: i32) -> (i32, i32) {
    %c0_i32 = arith.constant 0 : i32
    %c0_i32_0 = arith.constant 0 : i32
    %c0_i32_1 = arith.constant 0 : i32
    return %c0_i32, %c0_i32_0 : i32, i32
  }
  func.func @transform_3(%arg0: i32) -> (i32, i32) {
    %c0_i32 = arith.constant 0 : i32
    %c0_i32_0 = arith.constant 0 : i32
    %c0_i32_1 = arith.constant 0 : i32
    return %c0_i32, %c0_i32_0 : i32, i32
  }
  func.func @transform_4(%arg0: i32) -> (i32, i32) {
    %c0_i32 = arith.constant 0 : i32
    %c0_i32_0 = arith.constant 0 : i32
    %c0_i32_1 = arith.constant 0 : i32
    return %c0_i32, %c0_i32_0 : i32, i32
  }
  func.func @transform_5(%arg0: i32) -> (i32, i32, i32) {
    %c0_i32 = arith.constant 0 : i32
    %c0_i32_0 = arith.constant 0 : i32
    %c0_i32_1 = arith.constant 0 : i32
    return %arg0, %c0_i32, %c0_i32_0 : i32, i32, i32
  }
}

</mosaic_0001>

<llo_original>
// kernel: tpu_custom_call.1
$region0: #{tpu_custom_call.1}
  #allocation0 [shape = 'u32[]', space=smem, size = 0x4, offset = 0x4, fixed_abs, tag = 'smem constant byte address 0x4 - core index']
  #allocation1 [shape = 'u32[144,128]{1,0:T(1,128)}', space=vmem, size = 0x12000, scoped, tag = 'internal scratch']
  #allocation2 [shape = 'f32[8,256]{1,0:T(8,128)}', space=vmem, size = 0x2000, scoped, tag = 'scratch operand']
  %s0 = inlined_call_operand.hbm [shape: f32[8,256], index: 0, kind: input, shape index: {}]
  %s1 = inlined_call_operand.hbm [shape: f32[6,8,256], index: 1, kind: input, shape index: {}]
  %s2 = inlined_call_operand.hbm [shape: f32[256,256], index: 2, kind: input, shape index: {}]
  %s3 = inlined_call_operand.hbm [shape: f32[256,256], index: 3, kind: input, shape index: {}]
  %s4 = inlined_call_operand.vmem [shape: f32[1,256], index: 4, kind: input, shape index: {}]
  %s5 = inlined_call_operand.hbm [shape: f32[6,8,256], index: 5, kind: output, shape index: {}]
  %s6 = sld [smem:[#allocation0]]
  $region73: #{tpu_custom_call.1} parent=0
    _
  %s8 = ssub.s32 1, %s6
  %s9 = scalar_select 0, %s8, %s6
  $region1: #{tpu_custom_call.1} parent=0
    #allocation3 [shape = 'u8[8192]{0}', space=vmem, size = 0x2000, scoped, tag = 'input window, operand 0, single buffered']
    #allocation4 [shape = 's32[2]{0}', space=sflag, size = 0x8, scoped, tag = 'scoped memory for tpu_custom_call.1']
    #allocation5 [shape = 's32[2]{0}', space=sflag, size = 0x8, scoped, tag = 'scoped memory for tpu_custom_call.1']
    #allocation6 [shape = 'u8[16384]{0}', space=vmem, size = 0x4000, scoped, tag = 'input window, operand 1']
    #allocation7 [shape = 's32[2]{0}', space=sflag, size = 0x8, scoped, tag = 'scoped memory for tpu_custom_call.1']
    #allocation8 [shape = 'u8[262144]{0}', space=vmem, size = 0x40000, scoped, tag = 'input window, operand 2, single buffered']
    #allocation9 [shape = 'u8[262144]{0}', space=vmem, size = 0x40000, scoped, tag = 'input window, operand 3, single buffered']
    #allocation10 [shape = 's32[1]{0}', space=sflag, size = 0x4, scoped, tag = 'scoped memory for tpu_custom_call.1']
    #allocation11 [shape = 'u8[16384]{0}', space=vmem, size = 0x4000, scoped, tag = 'output window, operand 0']
    %10 = vsyncpa [#allocation4], 0
    %11 = vsyncpa [#allocation7], 0
    %s12 = scalar_lea.sflag [#allocation7], 1
    %13 = vsyncpa %s12, 0
    %14 = vsyncpa [#allocation10], 0
    %15 = vsyncpa [#allocation5], 0
    %s16 = scalar_lea.sflag [#allocation5], 1
    %17 = vsyncpa %s16, 0
    loop: start=0, step=1, limit=8
    $region2: #{tpu_custom_call.1} parent=1 // loop_pre_header
      _
    $region3: #{tpu_custom_call.1} parent=1 // loop_header
      %s19 = sphi 0, %s23
      %p20 = scmp.ge.s32.totalorder %s19, 8
      %s27 = sphi 0, %s27
      %s29 = sphi 0, %s27
      %s30 = sphi 0, %s29
      %s44 = sphi 0, %s30
      %s50 = sphi 0, %s52
      %s53 = sphi 0, %s50
      %s54 = sphi 0, %s53
      %s70 = sphi 0, %s54
      %s74 = sphi 0, %s74
      %s76 = sphi 0, %s74
      %s77 = sphi 0, %s76
      %s91 = sphi 0, %s77
      %s95 = sphi 0, %s95
      %s97 = sphi 0, %s95
      %s98 = sphi 0, %s97
      %s112 = sphi 0, %s98
      %s116 = sphi 0, %s116
      %s118 = sphi 0, %s116
      %s119 = sphi 0, %s118
      %s133 = sphi 0, %s119
      %s139 = sphi 0, %s141
      %s142 = sphi 0, %s139
      %s143 = sphi 0, %s142
      %s159 = sphi 0, %s143
    $region4: #{tpu_custom_call.1} parent=1 // loop_header_branch
      %22 = sbr.rel (%p20) target = $region8
    $region5: #{tpu_custom_call.1} parent=1 // loop_body
      %s24 = ssub.s32 %s19, 1
      %s25 = ssub.s32 %s19, 2
      %s26 = sadd.s32 %s19, 1
      %s28 = sadd.s32 %s27, 1
      %p31 = scmp.eq.s32.totalorder %s19, 5
      %p32 = scmp.ne.s32.totalorder %s27, %s29
      %p33 = scmp.eq.s32.totalorder %s19, 0
      %p34 = por %p32, %p33
      %p35 = scmp.ne.s32.totalorder %s27, %s29
      %p36 = scmp.eq.s32.totalorder %s24, 5
      %p37 = por %p35, %p36
      %p38 = scmp.ne.s32.totalorder %s29, %s30
      %p39 = scmp.eq.s32.totalorder %s24, 0
      %p40 = por %p38, %p39
      %p41 = scmp.ne.s32.totalorder %s29, %s30
      %p42 = scmp.eq.s32.totalorder %s25, 5
      %p43 = por %p41, %p42
      %p45 = scmp.ne.s32.totalorder %s30, %s44
      %p46 = scmp.eq.s32.totalorder %s25, 0
      %p47 = por %p45, %p46
      %s48 = ssub.s32 %s19, %s26
      %p49 = scmp.eq.s32.totalorder %s48, 0
      %s51 = sadd.s32 %s50, 1
      %s52 = scalar_select %p49, %s50, %s51
      %p55 = pneg %p49
      %p56 = scmp.eq.s32.totalorder %s19, 5
      %p57 = por %p55, %p56
      %p58 = scmp.ne.s32.totalorder %s50, %s53
      %p59 = scmp.eq.s32.totalorder %s19, 0
      %p60 = por %p58, %p59
      %p61 = scmp.ne.s32.totalorder %s50, %s53
      %p62 = scmp.eq.s32.totalorder %s24, 5
      %p63 = por %p61, %p62
      %p64 = scmp.ne.s32.totalorder %s53, %s54
      %p65 = scmp.eq.s32.totalorder %s24, 0
      %p66 = por %p64, %p65
      %p67 = scmp.ne.s32.totalorder %s53, %s54
      %p68 = scmp.eq.s32.totalorder %s25, 5
      %p69 = por %p67, %p68
      %p71 = scmp.ne.s32.totalorder %s54, %s70
      %p72 = scmp.eq.s32.totalorder %s25, 0
      %p73 = por %p71, %p72
      %s75 = sadd.s32 %s74, 1
      %p78 = scmp.eq.s32.totalorder %s19, 5
      %p79 = scmp.ne.s32.totalorder %s74, %s76
      %p80 = scmp.eq.s32.totalorder %s19, 0
      %p81 = por %p79, %p80
      %p82 = scmp.ne.s32.totalorder %s74, %s76
      %p83 = scmp.eq.s32.totalorder %s24, 5
      %p84 = por %p82, %p83
      %p85 = scmp.ne.s32.totalorder %s76, %s77
      %p86 = scmp.eq.s32.totalorder %s24, 0
      %p87 = por %p85, %p86
      %p88 = scmp.ne.s32.totalorder %s76, %s77
      %p89 = scmp.eq.s32.totalorder %s25, 5
      %p90 = por %p88, %p89
      %p92 = scmp.ne.s32.totalorder %s77, %s91
      %p93 = scmp.eq.s32.totalorder %s25, 0
      %p94 = por %p92, %p93
      %s96 = sadd.s32 %s95, 1
      %p99 = scmp.eq.s32.totalorder %s19, 5
      %p100 = scmp.ne.s32.totalorder %s95, %s97
      %p101 = scmp.eq.s32.totalorder %s19, 0
      %p102 = por %p100, %p101
      %p103 = scmp.ne.s32.totalorder %s95, %s97
      %p104 = scmp.eq.s32.totalorder %s24, 5
      %p105 = por %p103, %p104
      %p106 = scmp.ne.s32.totalorder %s97, %s98
      %p107 = scmp.eq.s32.totalorder %s24, 0
      %p108 = por %p106, %p107
      %p109 = scmp.ne.s32.totalorder %s97, %s98
      %p110 = scmp.eq.s32.totalorder %s25, 5
      %p111 = por %p109, %p110
      %p113 = scmp.ne.s32.totalorder %s98, %s112
      %p114 = scmp.eq.s32.totalorder %s25, 0
      %p115 = por %p113, %p114
      %s117 = sadd.s32 %s116, 1
      %p120 = scmp.eq.s32.totalorder %s19, 5
      %p121 = scmp.ne.s32.totalorder %s116, %s118
      %p122 = scmp.eq.s32.totalorder %s19, 0
      %p123 = por %p121, %p122
      %p124 = scmp.ne.s32.totalorder %s116, %s118
      %p125 = scmp.eq.s32.totalorder %s24, 5
      %p126 = por %p124, %p125
      %p127 = scmp.ne.s32.totalorder %s118, %s119
      %p128 = scmp.eq.s32.totalorder %s24, 0
      %p129 = por %p127, %p128
      %p130 = scmp.ne.s32.totalorder %s118, %s119
      %p131 = scmp.eq.s32.totalorder %s25, 5
      %p132 = por %p130, %p131
      %p134 = scmp.ne.s32.totalorder %s119, %s133
      %p135 = scmp.eq.s32.totalorder %s25, 0
      %p136 = por %p134, %p135
      %s137 = ssub.s32 %s19, %s26
      %p138 = scmp.eq.s32.totalorder %s137, 0
      %s140 = sadd.s32 %s139, 1
      %s141 = scalar_select %p138, %s139, %s140
      %p144 = pneg %p138
      %p145 = scmp.eq.s32.totalorder %s19, 5
      %p146 = por %p144, %p145
      %p147 = scmp.ne.s32.totalorder %s139, %s142
      %p148 = scmp.eq.s32.totalorder %s19, 0
      %p149 = por %p147, %p148
      %p150 = scmp.ne.s32.totalorder %s139, %s142
      %p151 = scmp.eq.s32.totalorder %s24, 5
      %p152 = por %p150, %p151
      %p153 = scmp.ne.s32.totalorder %s142, %s143
      %p154 = scmp.eq.s32.totalorder %s24, 0
      %p155 = por %p153, %p154
      %p156 = scmp.ne.s32.totalorder %s142, %s143
      %p157 = scmp.eq.s32.totalorder %s25, 5
      %p158 = por %p156, %p157
      %p160 = scmp.ne.s32.totalorder %s143, %s159
      %p161 = scmp.eq.s32.totalorder %s25, 0
      %p162 = por %p160, %p161
      %p163 = scmp.le.s32.totalorder 1, %s19
      %p164 = scmp.lt.s32.totalorder %s19, 7
      %p165 = pnand %p163, %p164
      %p166 = pneg %p165
      // Predicated region
      $region9: #{tpu_custom_call.1} parent=5 // pred_check
        _
      $region10: #{tpu_custom_call.1} parent=5 // pred_check_branch
        %168 = sbr.rel (%p165) target = $region12
      $region11: #{tpu_custom_call.1} parent=5 // pred_region
        %s169 = ssub.s32 %s19, 1
        // Predicated region
        $region13: #{tpu_custom_call.1} parent=11 // pred_check
          %p170 = pneg %p40
        $region14: #{tpu_custom_call.1} parent=11 // pred_check_branch
          %172 = sbr.rel (%p170) target = $region16
        $region15: #{tpu_custom_call.1} parent=11 // pred_region
          %s174 = ssub.s32 256, 256
          %175 = vsyncadd [#allocation4], %s174
          %s177 = sshll.u32 [#allocation3], 4
          %s178 = int_to_ptr.vmem [resolvable:$true] %s177
          %180 = dma.hbm_to_vmem [thread:$0]  %s0, 256, %s178, [#allocation4]
        $region16: #{tpu_custom_call.1} parent=11 // pred_fallthru
          _
        // Predicated region
        $region17: #{tpu_custom_call.1} parent=11 // pred_check
          %p181 = pneg %p87
        $region18: #{tpu_custom_call.1} parent=11 // pred_check_branch
          %183 = sbr.rel (%p181) target = $region20
        $region19: #{tpu_custom_call.1} parent=11 // pred_region
          %s185 = ssub.s32 8192, 8192
          %186 = vsyncadd [#allocation7], %s185
          %s187 = sshll.u32 [#allocation8], 4
          %s188 = int_to_ptr.vmem [resolvable:$true] %s187
          %193 = dma.hbm_to_vmem [thread:$0]  %s2, 8192, %s188, [#allocation7], 256, 256, 16
        $region20: #{tpu_custom_call.1} parent=11 // pred_fallthru
          _
        // Predicated region
        $region21: #{tpu_custom_call.1} parent=11 // pred_check
          %p194 = pneg %p108
        $region22: #{tpu_custom_call.1} parent=11 // pred_check_branch
          %196 = sbr.rel (%p194) target = $region24
        $region23: #{tpu_custom_call.1} parent=11 // pred_region
          %s198 = ssub.s32 8192, 8192
          %199 = vsyncadd [#allocation10], %s198
          %s200 = sshll.u32 [#allocation9], 4
          %s201 = int_to_ptr.vmem [resolvable:$true] %s200
          %206 = dma.hbm_to_vmem [thread:$0]  %s3, 8192, %s201, [#allocation10], 256, 256, 16
        $region24: #{tpu_custom_call.1} parent=11 // pred_fallthru
          _
        // Predicated region
        $region25: #{tpu_custom_call.1} parent=11 // pred_check
          %p207 = pneg %p129
        $region26: #{tpu_custom_call.1} parent=11 // pred_check_branch
          %209 = sbr.rel (%p207) target = $region28
        $region27: #{tpu_custom_call.1} parent=11 // pred_region
          _
        $region28: #{tpu_custom_call.1} parent=11 // pred_fallthru
          _
      $region12: #{tpu_custom_call.1} parent=5 // pred_fallthru
        _
      %p210 = scmp.lt.s32.totalorder %s19, 6
      // Predicated region
      $region29: #{tpu_custom_call.1} parent=5 // pred_check
        %p211 = pneg %p210
      $region30: #{tpu_custom_call.1} parent=5 // pred_check_branch
        %213 = sbr.rel (%p211) target = $region32
      $region31: #{tpu_custom_call.1} parent=5 // pred_region
        // Predicated region
        $region33: #{tpu_custom_call.1} parent=31 // pred_check
          %p214 = pneg %p60
        $region34: #{tpu_custom_call.1} parent=31 // pred_check_branch
          %216 = sbr.rel (%p214) target = $region36
        $region35: #{tpu_custom_call.1} parent=31 // pred_region
          %s217 = sand.u32 %s19, 1
          %s218 = scalar_lea.sflag [#allocation7], %s217
          %s219 = sand.u32 %s50, 1
          %s220 = smul.addr %s219, 16
          %s221 = scalar_lea.vmem [#allocation6], %s220
          %s223 = ssub.s32 256, 256
          %224 = vsyncadd %s218, %s223
          %s225 = smul.addr %s19, 2
          %s226 = smul.addr %s225, 128
          %s227 = scalar_lea.hbm %s1, %s226
          %s229 = sshll.u32 %s221, 4
          %s230 = int_to_ptr.vmem [resolvable:$true] %s229
          %232 = dma.hbm_to_vmem [thread:$0]  %s227, 256, %s230, %s218
        $region36: #{tpu_custom_call.1} parent=31 // pred_fallthru
          _
      $region32: #{tpu_custom_call.1} parent=5 // pred_fallthru
        _
      %p233 = scmp.le.s32.totalorder 1, %s19
      %p234 = scmp.lt.s32.totalorder %s19, 7
      %p235 = pnand %p233, %p234
      %p236 = pneg %p235
      // Predicated region
      $region37: #{tpu_custom_call.1} parent=5 // pred_check
        _
      $region38: #{tpu_custom_call.1} parent=5 // pred_check_branch
        %238 = sbr.rel (%p235) target = $region40
      $region39: #{tpu_custom_call.1} parent=5 // pred_region
        %s239 = ssub.s32 %s19, 1
        // Predicated region
        $region41: #{tpu_custom_call.1} parent=39 // pred_check
          %p240 = pneg %p40
        $region42: #{tpu_custom_call.1} parent=39 // pred_check_branch
          %242 = sbr.rel (%p240) target = $region44
        $region43: #{tpu_custom_call.1} parent=39 // pred_region
          %243 = dma.done [#allocation4], 256
        $region44: #{tpu_custom_call.1} parent=39 // pred_fallthru
          _
        %s244 = sand.u32 %s24, 1
        %s245 = scalar_lea.sflag [#allocation7], %s244
        %s246 = sand.u32 %s53, 1
        %s247 = smul.addr %s246, 16
        %s248 = scalar_lea.vmem [#allocation6], %s247
        // Predicated region
        $region45: #{tpu_custom_call.1} parent=39 // pred_check
          %p249 = pneg %p66
        $region46: #{tpu_custom_call.1} parent=39 // pred_check_branch
          %251 = sbr.rel (%p249) target = $region48
        $region47: #{tpu_custom_call.1} parent=39 // pred_region
          %252 = dma.done %s245, 256
        $region48: #{tpu_custom_call.1} parent=39 // pred_fallthru
          _
        // Predicated region
        $region49: #{tpu_custom_call.1} parent=39 // pred_check
          %p253 = pneg %p87
        $region50: #{tpu_custom_call.1} parent=39 // pred_check_branch
          %255 = sbr.rel (%p253) target = $region52
        $region51: #{tpu_custom_call.1} parent=39 // pred_region
          %256 = dma.done [#allocation7], 8192
        $region52: #{tpu_custom_call.1} parent=39 // pred_fallthru
          _
        // Predicated region
        $region53: #{tpu_custom_call.1} parent=39 // pred_check
          %p257 = pneg %p108
        $region54: #{tpu_custom_call.1} parent=39 // pred_check_branch
          %259 = sbr.rel (%p257) target = $region56
        $region55: #{tpu_custom_call.1} parent=39 // pred_region
          %260 = dma.done [#allocation10], 8192
        $region56: #{tpu_custom_call.1} parent=39 // pred_fallthru
          _
        %p261 = pneg %p40
        %p262 = pneg %p37
        %s263 = sand.u32 %s24, 1
        %s264 = scalar_lea.sflag [#allocation7], %s263
        %s265 = sand.u32 %s53, 1
        %s266 = smul.addr %s265, 16
        %s267 = scalar_lea.vmem [#allocation6], %s266
        %p268 = pneg %p66
        %p269 = pneg %p63
        %p270 = pneg %p87
        %p271 = pneg %p84
        %p272 = pneg %p108
        %p273 = pneg %p105
        %p274 = pneg %p129
        %p275 = pneg %p126
        %p276 = pneg %p155
        %p277 = pneg %p152
        %s278 = sand.u32 %s142, 1
        %s279 = scalar_lea.sflag [#allocation5], %s278
        %s280 = sand.u32 %s142, 1
        %s281 = smul.addr %s280, 16
        %s282 = scalar_lea.vmem [#allocation11], %s281
        %p283 = scmp.eq.s32.totalorder %s24, 0
        // Predicated region
        $region57: #{tpu_custom_call.1} parent=39 // pred_check
          %p284 = pneg %p283
        $region58: #{tpu_custom_call.1} parent=39 // pred_check_branch
          %286 = sbr.rel (%p284) target = $region60
        $region59: #{tpu_custom_call.1} parent=39 // pred_region
          %v287 = vld [vmem:[#allocation3] sm:$0xff]
          %v288 = vld [vmem:[#allocation3 + $0x8] sm:$0xff]
          %289 = vst [vmem:[#allocation2] sm:$0xff] %v287
          %290 = vst [vmem:[#allocation2 + $0x8] sm:$0xff] %v288
        $region60: #{tpu_custom_call.1} parent=39 // pred_fallthru
          _
        %v291 = vld [vmem:[%s248] sm:$0xff]
        %v292 = vld [vmem:[%s248 + $0x8] sm:$0xff]
        %v293 = vld [vmem:[#allocation2] sm:$0xff]
        %v294 = vld [vmem:[#allocation2 + $0x8] sm:$0xff]
        %v295 = vld [vmem:[#allocation8] sm:$0xff]
        %v296 = vld [vmem:[#allocation8 + $0x8] sm:$0xff]
        %v297 = vld [vmem:[#allocation8 + $0x10] sm:$0xff]
        %v298 = vld [vmem:[#allocation8 + $0x18] sm:$0xff]
        %v299 = vld [vmem:[#allocation8 + $0x20] sm:$0xff]
        %v300 = vld [vmem:[#allocation8 + $0x28] sm:$0xff]
        %v301 = vld [vmem:[#allocation8 + $0x30] sm:$0xff]
        %v302 = vld [vmem:[#allocation8 + $0x38] sm:$0xff]
        %v303 = vld [vmem:[#allocation8 + $0x40] sm:$0xff]
        %v304 = vld [vmem:[#allocation8 + $0x48] sm:$0xff]
        %v305 = vld [vmem:[#allocation8 + $0x50] sm:$0xff]
        %v306 = vld [vmem:[#allocation8 + $0x58] sm:$0xff]
        %v307 = vld [vmem:[#allocation8 + $0x60] sm:$0xff]
        %v308 = vld [vmem:[#allocation8 + $0x68] sm:$0xff]
        %v309 = vld [vmem:[#allocation8 + $0x70] sm:$0xff]
        %v310 = vld [vmem:[#allocation8 + $0x78] sm:$0xff]
        %v311 = vld [vmem:[#allocation8 + $0x80] sm:$0xff]
        %v312 = vld [vmem:[#allocation8 + $0x88] sm:$0xff]
        %v313 = vld [vmem:[#allocation8 + $0x90] sm:$0xff]
        %v314 = vld [vmem:[#allocation8 + $0x98] sm:$0xff]
        %v315 = vld [vmem:[#allocation8 + $0xa0] sm:$0xff]
        %v316 = vld [vmem:[#allocation8 + $0xa8] sm:$0xff]
        %v317 = vld [vmem:[#allocation8 + $0xb0] sm:$0xff]
        %v318 = vld [vmem:[#allocation8 + $0xb8] sm:$0xff]
        %v319 = vld [vmem:[#allocation8 + $0xc0] sm:$0xff]
        %v320 = vld [vmem:[#allocation8 + $0xc8] sm:$0xff]
        %v321 = vld [vmem:[#allocation8 + $0xd0] sm:$0xff]
        %v322 = vld [vmem:[#allocation8 + $0xd8] sm:$0xff]
        %v323 = vld [vmem:[#allocation8 + $0xe0] sm:$0xff]
        %v324 = vld [vmem:[#allocation8 + $0xe8] sm:$0xff]
        %v325 = vld [vmem:[#allocation8 + $0xf0] sm:$0xff]
        %v326 = vld [vmem:[#allocation8 + $0xf8] sm:$0xff]
        %v327 = vld [vmem:[#allocation8 + $0x100] sm:$0xff]
        %v328 = vld [vmem:[#allocation8 + $0x108] sm:$0xff]
        %v329 = vld [vmem:[#allocation8 + $0x110] sm:$0xff]
        %v330 = vld [vmem:[#allocation8 + $0x118] sm:$0xff]
        %v331 = vld [vmem:[#allocation8 + $0x120] sm:$0xff]
        %v332 = vld [vmem:[#allocation8 + $0x128] sm:$0xff]
        %v333 = vld [vmem:[#allocation8 + $0x130] sm:$0xff]
        %v334 = vld [vmem:[#allocation8 + $0x138] sm:$0xff]
        %v335 = vld [vmem:[#allocation8 + $0x140] sm:$0xff]
        %v336 = vld [vmem:[#allocation8 + $0x148] sm:$0xff]
        %v337 = vld [vmem:[#allocation8 + $0x150] sm:$0xff]
        %v338 = vld [vmem:[#allocation8 + $0x158] sm:$0xff]
        %v339 = vld [vmem:[#allocation8 + $0x160] sm:$0xff]
        %v340 = vld [vmem:[#allocation8 + $0x168] sm:$0xff]
        %v341 = vld [vmem:[#allocation8 + $0x170] sm:$0xff]
        %v342 = vld [vmem:[#allocation8 + $0x178] sm:$0xff]
        %v343 = vld [vmem:[#allocation8 + $0x180] sm:$0xff]
        %v344 = vld [vmem:[#allocation8 + $0x188] sm:$0xff]
        %v345 = vld [vmem:[#allocation8 + $0x190] sm:$0xff]
        %v346 = vld [vmem:[#allocation8 + $0x198] sm:$0xff]
        %v347 = vld [vmem:[#allocation8 + $0x1a0] sm:$0xff]
        %v348 = vld [vmem:[#allocation8 + $0x1a8] sm:$0xff]
        %v349 = vld [vmem:[#allocation8 + $0x1b0] sm:$0xff]
        %v350 = vld [vmem:[#allocation8 + $0x1b8] sm:$0xff]
        %v351 = vld [vmem:[#allocation8 + $0x1c0] sm:$0xff]
        %v352 = vld [vmem:[#allocation8 + $0x1c8] sm:$0xff]
        %v353 = vld [vmem:[#allocation8 + $0x1d0] sm:$0xff]
        %v354 = vld [vmem:[#allocation8 + $0x1d8] sm:$0xff]
        %v355 = vld [vmem:[#allocation8 + $0x1e0] sm:$0xff]
        %v356 = vld [vmem:[#allocation8 + $0x1e8] sm:$0xff]
        %v357 = vld [vmem:[#allocation8 + $0x1f0] sm:$0xff]
        %v358 = vld [vmem:[#allocation8 + $0x1f8] sm:$0xff]
        %v359 = vld [vmem:[#allocation9] sm:$0xff]
        %v360 = vld [vmem:[#allocation9 + $0x8] sm:$0xff]
        %v361 = vld [vmem:[#allocation9 + $0x10] sm:$0xff]
        %v362 = vld [vmem:[#allocation9 + $0x18] sm:$0xff]
        %v363 = vld [vmem:[#allocation9 + $0x20] sm:$0xff]
        %v364 = vld [vmem:[#allocation9 + $0x28] sm:$0xff]
        %v365 = vld [vmem:[#allocation9 + $0x30] sm:$0xff]
        %v366 = vld [vmem:[#allocation9 + $0x38] sm:$0xff]
        %v367 = vld [vmem:[#allocation9 + $0x40] sm:$0xff]
        %v368 = vld [vmem:[#allocation9 + $0x48] sm:$0xff]
        %v369 = vld [vmem:[#allocation9 + $0x50] sm:$0xff]
        %v370 = vld [vmem:[#allocation9 + $0x58] sm:$0xff]
        %v371 = vld [vmem:[#allocation9 + $0x60] sm:$0xff]
        %v372 = vld [vmem:[#allocation9 + $0x68] sm:$0xff]
        %v373 = vld [vmem:[#allocation9 + $0x70] sm:$0xff]
        %v374 = vld [vmem:[#allocation9 + $0x78] sm:$0xff]
        %v375 = vld [vmem:[#allocation9 + $0x80] sm:$0xff]
        %v376 = vld [vmem:[#allocation9 + $0x88] sm:$0xff]
        %v377 = vld [vmem:[#allocation9 + $0x90] sm:$0xff]
        %v378 = vld [vmem:[#allocation9 + $0x98] sm:$0xff]
        %v379 = vld [vmem:[#allocation9 + $0xa0] sm:$0xff]
        %v380 = vld [vmem:[#allocation9 + $0xa8] sm:$0xff]
        %v381 = vld [vmem:[#allocation9 + $0xb0] sm:$0xff]
        %v382 = vld [vmem:[#allocation9 + $0xb8] sm:$0xff]
        %v383 = vld [vmem:[#allocation9 + $0xc0] sm:$0xff]
        %v384 = vld [vmem:[#allocation9 + $0xc8] sm:$0xff]
        %v385 = vld [vmem:[#allocation9 + $0xd0] sm:$0xff]
        %v386 = vld [vmem:[#allocation9 + $0xd8] sm:$0xff]
        %v387 = vld [vmem:[#allocation9 + $0xe0] sm:$0xff]
        %v388 = vld [vmem:[#allocation9 + $0xe8] sm:$0xff]
        %v389 = vld [vmem:[#allocation9 + $0xf0] sm:$0xff]
        %v390 = vld [vmem:[#allocation9 + $0xf8] sm:$0xff]
        %v391 = vld [vmem:[#allocation9 + $0x100] sm:$0xff]
        %v392 = vld [vmem:[#allocation9 + $0x108] sm:$0xff]
        %v393 = vld [vmem:[#allocation9 + $0x110] sm:$0xff]
        %v394 = vld [vmem:[#allocation9 + $0x118] sm:$0xff]
        %v395 = vld [vmem:[#allocation9 + $0x120] sm:$0xff]
        %v396 = vld [vmem:[#allocation9 + $0x128] sm:$0xff]
        %v397 = vld [vmem:[#allocation9 + $0x130] sm:$0xff]
        %v398 = vld [vmem:[#allocation9 + $0x138] sm:$0xff]
        %v399 = vld [vmem:[#allocation9 + $0x140] sm:$0xff]
        %v400 = vld [vmem:[#allocation9 + $0x148] sm:$0xff]
        %v401 = vld [vmem:[#allocation9 + $0x150] sm:$0xff]
        %v402 = vld [vmem:[#allocation9 + $0x158] sm:$0xff]
        %v403 = vld [vmem:[#allocation9 + $0x160] sm:$0xff]
        %v404 = vld [vmem:[#allocation9 + $0x168] sm:$0xff]
        %v405 = vld [vmem:[#allocation9 + $0x170] sm:$0xff]
        %v406 = vld [vmem:[#allocation9 + $0x178] sm:$0xff]
        %v407 = vld [vmem:[#allocation9 + $0x180] sm:$0xff]
        %v408 = vld [vmem:[#allocation9 + $0x188] sm:$0xff]
        %v409 = vld [vmem:[#allocation9 + $0x190] sm:$0xff]
        %v410 = vld [vmem:[#allocation9 + $0x198] sm:$0xff]
        %v411 = vld [vmem:[#allocation9 + $0x1a0] sm:$0xff]
        %v412 = vld [vmem:[#allocation9 + $0x1a8] sm:$0xff]
        %v413 = vld [vmem:[#allocation9 + $0x1b0] sm:$0xff]
        %v414 = vld [vmem:[#allocation9 + $0x1b8] sm:$0xff]
        %v415 = vld [vmem:[#allocation9 + $0x1c0] sm:$0xff]
        %v416 = vld [vmem:[#allocation9 + $0x1c8] sm:$0xff]
        %v417 = vld [vmem:[#allocation9 + $0x1d0] sm:$0xff]
        %v418 = vld [vmem:[#allocation9 + $0x1d8] sm:$0xff]
        %v419 = vld [vmem:[#allocation9 + $0x1e0] sm:$0xff]
        %v420 = vld [vmem:[#allocation9 + $0x1e8] sm:$0xff]
        %v421 = vld [vmem:[#allocation9 + $0x1f0] sm:$0xff]
        %v422 = vld [vmem:[#allocation9 + $0x1f8] sm:$0xff]
        %423 = vmatprep.subr.mxu0 %v390
        %424 = vmatpush1.msra.mxu0 %v389
        %425 = vmatprep.subr.mxu0 %v388
        %426 = vmatpush1.msra.mxu0 %v387
        %427 = vmatprep.subr.mxu0 %v386
        %428 = vmatpush1.msra.mxu0 %v385
        %429 = vmatprep.subr.mxu0 %v384
        %430 = vmatpush1.msra.mxu0 %v383
        %431 = vmatprep.subr.mxu0 %v382
        %432 = vmatpush1.msra.mxu0 %v381
        %433 = vmatprep.subr.mxu0 %v380
        %434 = vmatpush1.msra.mxu0 %v379
        %435 = vmatprep.subr.mxu0 %v378
        %436 = vmatpush1.msra.mxu0 %v377
        %437 = vmatprep.subr.mxu0 %v376
        %438 = vmatpush1.msra.mxu0 %v375
        %439 = vmatprep.subr.mxu0 %v374
        %440 = vmatpush1.msra.mxu0 %v373
        %441 = vmatprep.subr.mxu0 %v372
        %442 = vmatpush1.msra.mxu0 %v371
        %443 = vmatprep.subr.mxu0 %v370
        %444 = vmatpush1.msra.mxu0 %v369
        %445 = vmatprep.subr.mxu0 %v368
        %446 = vmatpush1.msra.mxu0 %v367
        %447 = vmatprep.subr.mxu0 %v366
        %448 = vmatpush1.msra.mxu0 %v365
        %449 = vmatprep.subr.mxu0 %v364
        %450 = vmatpush1.msra.mxu0 %v363
        %451 = vmatprep.subr.mxu0 %v362
        %452 = vmatpush1.msra.mxu0 %v361
        %453 = vmatprep.subr.mxu0 %v360
        %454 = vmatpush1.msra.mxu0 %v359
        %455 = vmatprep.subr.mxu0 %v422
        %456 = vmatpush2.msra.mxu0 %v421
        %457 = vmatprep.subr.mxu0 %v420
        %458 = vmatpush2.msra.mxu0 %v419
        %459 = vmatprep.subr.mxu0 %v418
        %460 = vmatpush2.msra.mxu0 %v417
        %461 = vmatprep.subr.mxu0 %v416
        %462 = vmatpush2.msra.mxu0 %v415
        %463 = vmatprep.subr.mxu0 %v414
        %464 = vmatpush2.msra.mxu0 %v413
        %465 = vmatprep.subr.mxu0 %v412
        %466 = vmatpush2.msra.mxu0 %v411
        %467 = vmatprep.subr.mxu0 %v410
        %468 = vmatpush2.msra.mxu0 %v409
        %469 = vmatprep.subr.mxu0 %v408
        %470 = vmatpush2.msra.mxu0 %v407
        %471 = vmatprep.subr.mxu0 %v406
        %472 = vmatpush2.msra.mxu0 %v405
        %473 = vmatprep.subr.mxu0 %v404
        %474 = vmatpush2.msra.mxu0 %v403
        %475 = vmatprep.subr.mxu0 %v402
        %476 = vmatpush2.msra.mxu0 %v401
        %477 = vmatprep.subr.mxu0 %v400
        %478 = vmatpush2.msra.mxu0 %v399
        %479 = vmatprep.subr.mxu0 %v398
        %480 = vmatpush2.msra.mxu0 %v397
        %481 = vmatprep.subr.mxu0 %v396
        %482 = vmatpush2.msra.mxu0 %v395
        %483 = vmatprep.subr.mxu0 %v394
        %484 = vmatpush2.msra.mxu0 %v393
        %485 = vmatprep.subr.mxu0 %v392
        %486 = vmatpush2.msra.mxu0 %v391
        %487 = vmatprep.mubr.f32.mxu0 %v294
        %488 = vmatmul.mubr.f32.gmra.mxu0 %v293
        %v489 = vpop.f32.mrf.mxu0
        %v490 = vadd.f32 0.0, %v489
        %v491 = vpop.f32.mrf.mxu0
        %v492 = vadd.f32 0.0, %v491
        %493 = vdwg.mxu0
        %494 = vmatprep.subr.mxu0 %v326
        %495 = vmatpush1.msra.mxu0 %v325
        %496 = vmatprep.subr.mxu0 %v324
        %497 = vmatpush1.msra.mxu0 %v323
        %498 = vmatprep.subr.mxu0 %v322
        %499 = vmatpush1.msra.mxu0 %v321
        %500 = vmatprep.subr.mxu0 %v320
        %501 = vmatpush1.msra.mxu0 %v319
        %502 = vmatprep.subr.mxu0 %v318
        %503 = vmatpush1.msra.mxu0 %v317
        %504 = vmatprep.subr.mxu0 %v316
        %505 = vmatpush1.msra.mxu0 %v315
        %506 = vmatprep.subr.mxu0 %v314
        %507 = vmatpush1.msra.mxu0 %v313
        %508 = vmatprep.subr.mxu0 %v312
        %509 = vmatpush1.msra.mxu0 %v311
        %510 = vmatprep.subr.mxu0 %v310
        %511 = vmatpush1.msra.mxu0 %v309
        %512 = vmatprep.subr.mxu0 %v308
        %513 = vmatpush1.msra.mxu0 %v307
        %514 = vmatprep.subr.mxu0 %v306
        %515 = vmatpush1.msra.mxu0 %v305
        %516 = vmatprep.subr.mxu0 %v304
        %517 = vmatpush1.msra.mxu0 %v303
        %518 = vmatprep.subr.mxu0 %v302
        %519 = vmatpush1.msra.mxu0 %v301
        %520 = vmatprep.subr.mxu0 %v300
        %521 = vmatpush1.msra.mxu0 %v299
        %522 = vmatprep.subr.mxu0 %v298
        %523 = vmatpush1.msra.mxu0 %v297
        %524 = vmatprep.subr.mxu0 %v296
        %525 = vmatpush1.msra.mxu0 %v295
        %526 = vmatprep.subr.mxu0 %v358
        %527 = vmatpush2.msra.mxu0 %v357
        %528 = vmatprep.subr.mxu0 %v356
        %529 = vmatpush2.msra.mxu0 %v355
        %530 = vmatprep.subr.mxu0 %v354
        %531 = vmatpush2.msra.mxu0 %v353
        %532 = vmatprep.subr.mxu0 %v352
        %533 = vmatpush2.msra.mxu0 %v351
        %534 = vmatprep.subr.mxu0 %v350
        %535 = vmatpush2.msra.mxu0 %v349
        %536 = vmatprep.subr.mxu0 %v348
        %537 = vmatpush2.msra.mxu0 %v347
        %538 = vmatprep.subr.mxu0 %v346
        %539 = vmatpush2.msra.mxu0 %v345
        %540 = vmatprep.subr.mxu0 %v344
        %541 = vmatpush2.msra.mxu0 %v343
        %542 = vmatprep.subr.mxu0 %v342
        %543 = vmatpush2.msra.mxu0 %v341
        %544 = vmatprep.subr.mxu0 %v340
        %545 = vmatpush2.msra.mxu0 %v339
        %546 = vmatprep.subr.mxu0 %v338
        %547 = vmatpush2.msra.mxu0 %v337
        %548 = vmatprep.subr.mxu0 %v336
        %549 = vmatpush2.msra.mxu0 %v335
        %550 = vmatprep.subr.mxu0 %v334
        %551 = vmatpush2.msra.mxu0 %v333
        %552 = vmatprep.subr.mxu0 %v332
        %553 = vmatpush2.msra.mxu0 %v331
        %554 = vmatprep.subr.mxu0 %v330
        %555 = vmatpush2.msra.mxu0 %v329
        %556 = vmatprep.subr.mxu0 %v328
        %557 = vmatpush2.msra.mxu0 %v327
        %558 = vmatprep.mubr.f32.mxu0 %v292
        %559 = vmatmul.mubr.f32.gmra.mxu0 %v291
        %v560 = vpop.f32.mrf.mxu0
        %v561 = vadd.f32 %v490, %v560
        %v562 = vpop.f32.mrf.mxu0
        %v563 = vadd.f32 %v492, %v562
        %564 = vdwg.mxu0
        %v565 = vld [vmem:[%s4] sm:$0x3]
        %v567 = vlaneseq
        %v568 = vshrl.u32 %v567, 7
        %v569 = vsub.s32 0, %v568
        %v570 = vrot.slane %v565, %v569
        %v571 = vlaneseq
        %v572 = vshrl.u32 %v571, 7
        %v573 = vsub.s32 1, %v572
        %v574 = vrot.slane %v565, %v573
        %v577 = vadd.f32 %v561, %v570
        %v578 = vadd.f32 %v563, %v574
        %v579 = vmax.f32 %v577, 0.0
        %v580 = vmax.f32 %v578, 0.0
        %581 = vst [vmem:[#allocation2] sm:$0xff] %v579
        %582 = vst [vmem:[#allocation2 + $0x8] sm:$0xff] %v580
        %583 = vst [vmem:[%s282] sm:$0xff] %v579
        %584 = vst [vmem:[%s282 + $0x8] sm:$0xff] %v580
        %s585 = sand.u32 %s142, 1
        %s586 = scalar_lea.sflag [#allocation5], %s585
        %s587 = sand.u32 %s142, 1
        %s588 = smul.addr %s587, 16
        %s589 = scalar_lea.vmem [#allocation11], %s588
        // Predicated region
        $region61: #{tpu_custom_call.1} parent=39 // pred_check
          %p590 = pneg %p152
        $region62: #{tpu_custom_call.1} parent=39 // pred_check_branch
          %592 = sbr.rel (%p590) target = $region64
        $region63: #{tpu_custom_call.1} parent=39 // pred_region
          %s594 = ssub.s32 256, 256
          %595 = vsyncadd %s586, %s594
          %s596 = smul.addr %s24, 2
          %s597 = smul.addr %s596, 128
          %s598 = scalar_lea.hbm %s5, %s597
          %s600 = sshll.u32 %s589, 4
          %s601 = int_to_ptr.vmem [resolvable:$true] %s600
          %603 = dma.vmem_to_hbm [thread:$0]  %s601, 256, %s598, %s586
        $region64: #{tpu_custom_call.1} parent=39 // pred_fallthru
          _
      $region40: #{tpu_custom_call.1} parent=5 // pred_fallthru
        _
      %p604 = scmp.le.s32.totalorder 2, %s19
      // Predicated region
      $region65: #{tpu_custom_call.1} parent=5 // pred_check
        %p605 = pneg %p604
      $region66: #{tpu_custom_call.1} parent=5 // pred_check_branch
        %607 = sbr.rel (%p605) target = $region68
      $region67: #{tpu_custom_call.1} parent=5 // pred_region
        %s608 = ssub.s32 %s19, 2
        // Predicated region
        $region69: #{tpu_custom_call.1} parent=67 // pred_check
          %p609 = pneg %p158
        $region70: #{tpu_custom_call.1} parent=67 // pred_check_branch
          %611 = sbr.rel (%p609) target = $region72
        $region71: #{tpu_custom_call.1} parent=67 // pred_region
          %s612 = sand.u32 %s143, 1
          %s613 = scalar_lea.sflag [#allocation5], %s612
          %s614 = sand.u32 %s143, 1
          %s615 = smul.addr %s614, 16
          %s616 = scalar_lea.vmem [#allocation11], %s615
          %617 = dma.done %s613, 256
        $region72: #{tpu_custom_call.1} parent=67 // pred_fallthru
          _
      $region68: #{tpu_custom_call.1} parent=5 // pred_fallthru
        _
    $region6: #{tpu_custom_call.1} parent=1 // loop_footer
      %s23 = sadd.s32 1, %s19
    $region7: #{tpu_custom_call.1} parent=1 // loop_footer_branch
      %18 = sbr.rel target = $region3
    $region8: #{tpu_custom_call.1} parent=1 // loop_exit
      _
    %618 = vsyncpa [#allocation4], 1
    %s619 = scalar_lea.sflag [#allocation4], 1
    %620 = vsyncpa %s619, 1
    %621 = vsyncpa [#allocation7], 1
    %s622 = scalar_lea.sflag [#allocation7], 1
    %623 = vsyncpa %s622, 1
    %624 = vsyncpa [#allocation10], 1
    %625 = vsyncpa [#allocation5], 1
    %s626 = scalar_lea.sflag [#allocation5], 1
    %627 = vsyncpa %s626, 1

</llo_original>
